<compile_context>
chip_gen: v7x
topology: tpu7x:2x2x1
jax: 0.10.0
libtpu: 0.0.40
codegen_flags: <defaults>
</compile_context>

<pallas_src>
import functools

import jax
import jax.numpy as jnp
from jax.experimental import pallas as pl
from jax.experimental.pallas import tpu as pltpu

_LANE = 128
_SUB = 8
# Bt * Ts cap -> 2 MiB per (channel, buffer) block; 6 streams x 2 buffers
# => ~24 MiB of buffered input, comfortably under v7x's 64 MiB physical VMEM.
_MAX_BLOCK_ROWS = 4096


def _bce_logits(x, z):
    # Numerically stable BCEWithLogits (elementwise), same formula as PyTorch.
    return jnp.maximum(x, 0.0) - x * z + jnp.log1p(jnp.exp(-jnp.abs(x)))


def _loss_kernel(p0_ref, p1_ref, pc_ref, t0_ref, t1_ref, tc_ref,
                 acc_ref, cent_ref, msum_ref, *, HW, Ts, masked):
    s = pl.program_id(1)

    @pl.when(s == 0)
    def _():
        acc_ref[...] = jnp.zeros_like(acc_ref)
        cent_ref[...] = jnp.zeros_like(cent_ref)
        msum_ref[...] = jnp.zeros_like(msum_ref)

    # (Bt, Ts, 128) lane/sublane-dense channel slabs.
    x0 = p0_ref[:, 0].astype(jnp.float32)   # tissue logits
    x1 = p1_ref[:, 0].astype(jnp.float32)   # "whole" logits
    xc = pc_ref[:, 0].astype(jnp.float32)   # centroid logits
    z0 = t0_ref[:, 0].astype(jnp.float32)   # tissue target
    z1 = t1_ref[:, 0].astype(jnp.float32)   # "whole" target
    zc = tc_ref[:, 0].astype(jnp.float32)   # centroid target

    if masked:
        # Spatial-padding validity mask (only traced when HW was padded).
        row = jax.lax.broadcasted_iota(jnp.int32, x0.shape, 1)
        lane = jax.lax.broadcasted_iota(jnp.int32, x0.shape, 2)
        flat = (s * Ts + row) * _LANE + lane
        valid = (flat < HW).astype(jnp.float32)
    else:
        valid = None

    # ---- tissue loss pieces: plain BCE over channel 0.
    tissue = _bce_logits(x0, z0)
    if valid is not None:
        tissue = tissue * valid
    tissue_p = jnp.sum(tissue, axis=(0, 1))                      # (128,)

    # ---- whole loss pieces: BCE over channel 1 where roi != 0.
    cent_tgt = zc - zc * z0
    roi = 1.0 - cent_tgt * (1.0 - z1)
    w = (roi != 0.0).astype(jnp.float32)
    if valid is not None:
        w = w * valid
    whole_p = jnp.sum(w * _bce_logits(x1, z1), axis=(0, 1))      # (128,)
    wcnt_p = jnp.sum(w, axis=(0, 1))                             # (128,)

    # ---- centroid loss pieces: per-sample per-lane partials
    #      (the per-sample selection gate is resolved in the wrapper).
    cbce = _bce_logits(xc, cent_tgt)
    if valid is not None:
        cbce = cbce * valid
        zc = zc * valid
    cent_p = jnp.sum(cbce, axis=1)                               # (Bt, 128)
    msum_p = jnp.sum(zc, axis=1)                                 # (Bt, 128)

    # Single full-tile accumulator RMW (rows 0..2 used, rest stay zero).
    upd = jnp.concatenate(
        [tissue_p[None], whole_p[None], wcnt_p[None],
         jnp.zeros((5, _LANE), jnp.float32)], axis=0)            # (8, 128)
    acc_ref[0] += upd
    cent_ref[0] += cent_p
    msum_ref[0] += msum_p


def _largest_divisor_at_most(n, cap, multiple_of=1):
    best = None
    d = 1
    while d * d <= n:
        if n % d == 0:
            for c in (d, n // d):
                if c <= cap and c % multiple_of == 0 and (best is None or c > best):
                    best = c
        d += 1
    return best


def whether_centroid_presented_bce(pred, target):
    """Pallas implementation of WhetherCentroidPresentedBCE.forward."""
    B, C, H, W = pred.shape
    HW = H * W

    # ---- tiling choice ------------------------------------------------------
    HW_pad = -(-HW // _LANE) * _LANE
    S = HW_pad // _LANE
    if S <= _MAX_BLOCK_ROWS:
        # Whole (padded) spatial extent per step; block several samples.
        Ts = S
        Bt = _largest_divisor_at_most(B, max(1, _MAX_BLOCK_ROWS // S)) or 1
    else:
        # Very large images: chunk the spatial axis.  Pad so S % 8 == 0, which
        # guarantees a legal multiple-of-8 chunk size exists (8,128 rule).
        HW_pad = -(-HW // (_LANE * _SUB)) * (_LANE * _SUB)
        S = HW_pad // _LANE
        Bt = 1
        Ts = _largest_divisor_at_most(S, _MAX_BLOCK_ROWS, multiple_of=_SUB) or _SUB
    NB, NS = B // Bt, S // Ts
    masked = HW_pad != HW

    # ---- layout: (B, C, S, 128) lane-dense f32 ------------------------------
    # For f32 inputs with HW % 128 == 0 this is copy-free (reshape of
    # contiguous trailing dims); only padded / non-f32 inputs get one copy.
    def prep(x):
        x = x.astype(jnp.float32).reshape(B, C, HW)
        if masked:
            x = jnp.pad(x, ((0, 0), (0, 0), (0, HW_pad - HW)))
        return x.reshape(B, C, S, _LANE)

    pred4 = prep(pred)
    tgt4 = prep(target)

    ch_t, ch_w, ch_c = 0, (1 if C > 1 else 0), C - 1

    def ch_spec(k):
        return pl.BlockSpec((Bt, 1, Ts, _LANE), lambda b, s, k=k: (b, k, s, 0))

    in_specs = [ch_spec(ch_t), ch_spec(ch_w), ch_spec(ch_c),
                ch_spec(ch_t), ch_spec(ch_w), ch_spec(ch_c)]

    out_shape = (
        jax.ShapeDtypeStruct((NB, 8, _LANE), jnp.float32),    # global per-lane partials
        jax.ShapeDtypeStruct((NB, Bt, _LANE), jnp.float32),   # per-sample centroid BCE sums
        jax.ShapeDtypeStruct((NB, Bt, _LANE), jnp.float32),   # per-sample centroid mask sums
    )
    out_specs = (
        pl.BlockSpec((1, 8, _LANE), lambda b, s: (b, 0, 0)),
        pl.BlockSpec((1, Bt, _LANE), lambda b, s: (b, 0, 0)),
        pl.BlockSpec((1, Bt, _LANE), lambda b, s: (b, 0, 0)),
    )

    block_bytes = Bt * Ts * _LANE * 4
    vmem_limit = int(min(60 * 1024 * 1024,
                         max(32 * 1024 * 1024, 12 * block_bytes + (4 << 20))))

    cost = pl.CostEstimate(
        flops=int(30 * B * HW_pad),
        transcendentals=int(6 * B * HW_pad),
        bytes_accessed=int(2 * 3 * B * HW_pad * 4),
    )

    acc, cent, msum = pl.pallas_call(
        functools.partial(_loss_kernel, HW=HW, Ts=Ts, masked=masked),
        out_shape=out_shape,
        grid_spec=pltpu.PrefetchScalarGridSpec(
            num_scalar_prefetch=0,
            grid=(NB, NS),
            in_specs=in_specs,
            out_specs=out_specs,
        ),
        compiler_params=pltpu.CompilerParams(
            dimension_semantics=("parallel", "arbitrary"),
            vmem_limit_bytes=vmem_limit,
        ),
        cost_estimate=cost,
    )(pred4, pred4, pred4, tgt4, tgt4, tgt4)

    # ---- tiny final combine (wrapper-side, negligible cost) -----------------
    tissue_sum = acc[:, 0, :].sum()
    whole_sum = acc[:, 1, :].sum()
    whole_cnt = acc[:, 2, :].sum()

    cent_ps = cent.reshape(B, _LANE).sum(-1)   # per-sample centroid BCE sums
    mask_ps = msum.reshape(B, _LANE).sum(-1)   # per-sample centroid-mask sums

    sel = (mask_ps != 0.0).astype(jnp.float32)
    n_sel = sel.sum()
    centroid_loss = jnp.where(
        mask_ps.sum() != 0.0,
        (sel * cent_ps).sum() / (jnp.maximum(n_sel, 1.0) * HW),
        0.0,
    )
    tissue_loss = tissue_sum / float(B * HW)
    # NOTE: whole_cnt == 0 (roi identically zero) yields NaN, matching
    # PyTorch's mean over an empty gather.
    whole_loss = whole_sum / whole_cnt
    return whole_loss + centroid_loss + tissue_loss


def _reference(pred, target):
    """Pure-JAX reference mirroring the PyTorch forward (for validation)."""
    B, C, H, W = pred.shape

    def bce_mean(x, z):
        return jnp.mean(jnp.maximum(x, 0.0) - x * z + jnp.log1p(jnp.exp(-jnp.abs(x))))

    mask = target[:, -1].reshape(B, -1).sum(1)
    centroid_loss = jnp.float32(0.0)
    if float(mask.sum()) != 0.0:
        idxs = jnp.nonzero(mask)[0]
        _t = target[idxs][:, -1:] - target[idxs][:, -1:] * target[idxs][:, :1]
        _p = pred[idxs][:, -1:]
        centroid_loss = bce_mean(_p, _t)
    tissue_loss = bce_mean(pred[:, :1], target[:, :1])
    t = target.reshape(B, C, -1)
    p = pred.reshape(B, C, -1)
    roi = 1.0 - (t[:, -1] - t[:, -1] * t[:, 0]) * (1.0 - t[:, 1])
    idxs = jnp.nonzero(roi.reshape(-1))[0]
    tsel = t[:, 1].reshape(-1)[idxs]
    psel = p[:, 1].reshape(-1)[idxs]
    whole_loss = bce_mean(psel, tsel)
    return whole_loss + centroid_loss + tissue_loss


if __name__ == "__main__":
    key = jax.random.PRNGKey(0)

    # ---- primary case: lane-aligned spatial extent (no padding path) --------
    k_pred, k_tgt, key = jax.random.split(key, 3)
    B, C, H, W = 2, 3, 16, 16
    pred = jax.random.normal(k_pred, (B, C, H, W), dtype=jnp.float32)
    target = jax.random.bernoulli(k_tgt, p=0.3, shape=(B, C, H, W)).astype(jnp.float32)

    out = whether_centroid_presented_bce(pred, target)
    out = jax.block_until_ready(out)
    ref = _reference(pred, target)
    assert jnp.allclose(out, ref, rtol=2e-4, atol=2e-4), (out, ref)

    # ---- secondary case: non-aligned spatial extent (masked padding path) ---
    k_pred2, k_tgt2, key = jax.random.split(key, 3)
    B2, C2, H2, W2 = 2, 3, 10, 10
    pred2 = jax.random.normal(k_pred2, (B2, C2, H2, W2), dtype=jnp.float32)
    target2 = jax.random.bernoulli(k_tgt2, p=0.3, shape=(B2, C2, H2, W2)).astype(jnp.float32)

    out2 = whether_centroid_presented_bce(pred2, target2)
    out2 = jax.block_until_ready(out2)
    ref2 = _reference(pred2, target2)
    assert jnp.allclose(out2, ref2, rtol=2e-4, atol=2e-4), (out2, ref2)

    print("KERNEL_OK")
</pallas_src>

<mosaic_0001>
module attributes {stable_mosaic.version = 11 : i64} {
  func.func @_loss_kernel(%arg0: i32, %arg1: i32, %arg2: memref<2x1x2x128xf32, #tpu.memory_space<vmem>>, %arg3: memref<2x1x2x128xf32, #tpu.memory_space<vmem>>, %arg4: memref<2x1x2x128xf32, #tpu.memory_space<vmem>>, %arg5: memref<2x1x2x128xf32, #tpu.memory_space<vmem>>, %arg6: memref<2x1x2x128xf32, #tpu.memory_space<vmem>>, %arg7: memref<2x1x2x128xf32, #tpu.memory_space<vmem>>, %arg8: memref<1x8x128xf32, #tpu.memory_space<vmem>>, %arg9: memref<1x2x128xf32, #tpu.memory_space<vmem>>, %arg10: memref<1x2x128xf32, #tpu.memory_space<vmem>>) attributes {dimension_semantics = [#tpu.dimension_semantics<parallel>, #tpu.dimension_semantics<arbitrary>], iteration_bounds = array<i64: 1, 1>, scalar_prefetch = 0 : i64, scratch_operands = 0 : i64, tpu.core_type = #tpu.core_type<tc>, window_params = [{transform_indices = @transform_0, window_bounds = array<i64: 2, 1, 2, 128>}, {transform_indices = @transform_1, window_bounds = array<i64: 2, 1, 2, 128>}, {transform_indices = @transform_2, window_bounds = array<i64: 2, 1, 2, 128>}, {transform_indices = @transform_3, window_bounds = array<i64: 2, 1, 2, 128>}, {transform_indices = @transform_4, window_bounds = array<i64: 2, 1, 2, 128>}, {transform_indices = @transform_5, window_bounds = array<i64: 2, 1, 2, 128>}, {transform_indices = @transform_6, window_bounds = array<i64: 1, 8, 128>}, {transform_indices = @transform_7, window_bounds = array<i64: 1, 2, 128>}, {transform_indices = @transform_8, window_bounds = array<i64: 1, 2, 128>}]} {
    %c0_i32 = arith.constant 0 : i32
    %0 = arith.cmpi eq, %arg1, %c0_i32 : i32
    %1 = arith.extui %0 : i1 to i32
    %c0_i32_0 = arith.constant 0 : i32
    %2 = arith.cmpi ne, %1, %c0_i32_0 : i32
    scf.if %2 {
      %cst_56 = arith.constant 0.000000e+00 : f32
      %85 = vector.broadcast %cst_56 : f32 to vector<1x8x128xf32>
      %c0_57 = arith.constant 0 : index
      %c0_58 = arith.constant 0 : index
      %c0_59 = arith.constant 0 : index
      %86 = vector.load %arg8[%c0_57, %c0_58, %c0_59] : memref<1x8x128xf32, #tpu.memory_space<vmem>>, vector<1x8x128xf32>
      tpu.vector_store %arg8[%c0_57, %c0_58, %c0_59], %85 {strides = array<i32>} : memref<1x8x128xf32, #tpu.memory_space<vmem>>, vector<1x8x128xf32>,
      %cst_60 = arith.constant 0.000000e+00 : f32
      %87 = vector.broadcast %cst_60 : f32 to vector<1x2x128xf32>
      %c0_61 = arith.constant 0 : index
      %c0_62 = arith.constant 0 : index
      %c0_63 = arith.constant 0 : index
      %88 = vector.load %arg9[%c0_61, %c0_62, %c0_63] : memref<1x2x128xf32, #tpu.memory_space<vmem>>, vector<1x2x128xf32>
      tpu.vector_store %arg9[%c0_61, %c0_62, %c0_63], %87 {strides = array<i32>} : memref<1x2x128xf32, #tpu.memory_space<vmem>>, vector<1x2x128xf32>,
      %cst_64 = arith.constant 0.000000e+00 : f32
      %89 = vector.broadcast %cst_64 : f32 to vector<1x2x128xf32>
      %c0_65 = arith.constant 0 : index
      %c0_66 = arith.constant 0 : index
      %c0_67 = arith.constant 0 : index
      %90 = vector.load %arg10[%c0_65, %c0_66, %c0_67] : memref<1x2x128xf32, #tpu.memory_space<vmem>>, vector<1x2x128xf32>
      tpu.vector_store %arg10[%c0_65, %c0_66, %c0_67], %89 {strides = array<i32>} : memref<1x2x128xf32, #tpu.memory_space<vmem>>, vector<1x2x128xf32>,
    } else {
    }
    %c0 = arith.constant 0 : index
    %c0_1 = arith.constant 0 : index
    %c0_2 = arith.constant 0 : index
    %c0_3 = arith.constant 0 : index
    %3 = vector.load %arg2[%c0, %c0_1, %c0_2, %c0_3] : memref<2x1x2x128xf32, #tpu.memory_space<vmem>>, vector<2x1x2x128xf32>
    %4 = vector.shape_cast %3 : vector<2x1x2x128xf32> to vector<2x2x128xf32>
    %c0_4 = arith.constant 0 : index
    %c0_5 = arith.constant 0 : index
    %c0_6 = arith.constant 0 : index
    %c0_7 = arith.constant 0 : index
    %5 = vector.load %arg3[%c0_4, %c0_5, %c0_6, %c0_7] : memref<2x1x2x128xf32, #tpu.memory_space<vmem>>, vector<2x1x2x128xf32>
    %6 = vector.shape_cast %5 : vector<2x1x2x128xf32> to vector<2x2x128xf32>
    %c0_8 = arith.constant 0 : index
    %c0_9 = arith.constant 0 : index
    %c0_10 = arith.constant 0 : index
    %c0_11 = arith.constant 0 : index
    %7 = vector.load %arg4[%c0_8, %c0_9, %c0_10, %c0_11] : memref<2x1x2x128xf32, #tpu.memory_space<vmem>>, vector<2x1x2x128xf32>
    %8 = vector.shape_cast %7 : vector<2x1x2x128xf32> to vector<2x2x128xf32>
    %c0_12 = arith.constant 0 : index
    %c0_13 = arith.constant 0 : index
    %c0_14 = arith.constant 0 : index
    %c0_15 = arith.constant 0 : index
    %9 = vector.load %arg5[%c0_12, %c0_13, %c0_14, %c0_15] : memref<2x1x2x128xf32, #tpu.memory_space<vmem>>, vector<2x1x2x128xf32>
    %10 = vector.shape_cast %9 : vector<2x1x2x128xf32> to vector<2x2x128xf32>
    %c0_16 = arith.constant 0 : index
    %c0_17 = arith.constant 0 : index
    %c0_18 = arith.constant 0 : index
    %c0_19 = arith.constant 0 : index
    %11 = vector.load %arg6[%c0_16, %c0_17, %c0_18, %c0_19] : memref<2x1x2x128xf32, #tpu.memory_space<vmem>>, vector<2x1x2x128xf32>
    %12 = vector.shape_cast %11 : vector<2x1x2x128xf32> to vector<2x2x128xf32>
    %c0_20 = arith.constant 0 : index
    %c0_21 = arith.constant 0 : index
    %c0_22 = arith.constant 0 : index
    %c0_23 = arith.constant 0 : index
    %13 = vector.load %arg7[%c0_20, %c0_21, %c0_22, %c0_23] : memref<2x1x2x128xf32, #tpu.memory_space<vmem>>, vector<2x1x2x128xf32>
    %14 = vector.shape_cast %13 : vector<2x1x2x128xf32> to vector<2x2x128xf32>
    %cst = arith.constant 0.000000e+00 : f32
    %15 = vector.broadcast %cst : f32 to vector<2x2x128xf32>
    %16 = arith.maximumf %4, %15 : vector<2x2x128xf32>
    %17 = arith.mulf %4, %10 : vector<2x2x128xf32>
    %18 = arith.subf %16, %17 : vector<2x2x128xf32>
    %19 = math.absf %4 : vector<2x2x128xf32>
    %cst_24 = arith.constant 0.000000e+00 : f32
    %20 = vector.broadcast %cst_24 : f32 to vector<2x2x128xf32>
    %21 = arith.subf %20, %19 : vector<2x2x128xf32>
    %22 = math.exp %21 : vector<2x2x128xf32>
    %23 = math.log1p %22 : vector<2x2x128xf32>
    %24 = arith.addf %18, %23 : vector<2x2x128xf32>
    %cst_25 = arith.constant dense<0.000000e+00> : vector<128xf32>
    %25 = vector.multi_reduction <add>, %24, %cst_25 [0, 1] : vector<2x2x128xf32> to vector<128xf32>
    %26 = arith.mulf %14, %10 : vector<2x2x128xf32>
    %27 = arith.subf %14, %26 : vector<2x2x128xf32>
    %cst_26 = arith.constant 1.000000e+00 : f32
    %28 = vector.broadcast %cst_26 : f32 to vector<2x2x128xf32>
    %29 = arith.subf %28, %12 : vector<2x2x128xf32>
    %30 = arith.mulf %27, %29 : vector<2x2x128xf32>
    %cst_27 = arith.constant 1.000000e+00 : f32
    %31 = vector.broadcast %cst_27 : f32 to vector<2x2x128xf32>
    %32 = arith.subf %31, %30 : vector<2x2x128xf32>
    %cst_28 = arith.constant 0.000000e+00 : f32
    %33 = vector.broadcast %cst_28 : f32 to vector<2x2x128xf32>
    %34 = arith.cmpf one, %32, %33 : vector<2x2x128xf32>
    %35 = arith.extui %34 : vector<2x2x128xi1> to vector<2x2x128xi32>
    %36 = arith.sitofp %35 : vector<2x2x128xi32> to vector<2x2x128xf32>
    %cst_29 = arith.constant 0.000000e+00 : f32
    %37 = vector.broadcast %cst_29 : f32 to vector<2x2x128xf32>
    %38 = arith.maximumf %6, %37 : vector<2x2x128xf32>
    %39 = arith.mulf %6, %12 : vector<2x2x128xf32>
    %40 = arith.subf %38, %39 : vector<2x2x128xf32>
    %41 = math.absf %6 : vector<2x2x128xf32>
    %cst_30 = arith.constant 0.000000e+00 : f32
    %42 = vector.broadcast %cst_30 : f32 to vector<2x2x128xf32>
    %43 = arith.subf %42, %41 : vector<2x2x128xf32>
    %44 = math.exp %43 : vector<2x2x128xf32>
    %45 = math.log1p %44 : vector<2x2x128xf32>
    %46 = arith.addf %40, %45 : vector<2x2x128xf32>
    %47 = arith.mulf %36, %46 : vector<2x2x128xf32>
    %cst_31 = arith.constant dense<0.000000e+00> : vector<128xf32>
    %48 = vector.multi_reduction <add>, %47, %cst_31 [0, 1] : vector<2x2x128xf32> to vector<128xf32>
    %cst_32 = arith.constant dense<0.000000e+00> : vector<128xf32>
    %49 = vector.multi_reduction <add>, %36, %cst_32 [0, 1] : vector<2x2x128xf32> to vector<128xf32>
    %cst_33 = arith.constant 0.000000e+00 : f32
    %50 = vector.broadcast %cst_33 : f32 to vector<2x2x128xf32>
    %51 = arith.maximumf %8, %50 : vector<2x2x128xf32>
    %52 = arith.mulf %8, %27 : vector<2x2x128xf32>
    %53 = arith.subf %51, %52 : vector<2x2x128xf32>
    %54 = math.absf %8 : vector<2x2x128xf32>
    %cst_34 = arith.constant 0.000000e+00 : f32
    %55 = vector.broadcast %cst_34 : f32 to vector<2x2x128xf32>
    %56 = arith.subf %55, %54 : vector<2x2x128xf32>
    %57 = math.exp %56 : vector<2x2x128xf32>
    %58 = math.log1p %57 : vector<2x2x128xf32>
    %59 = arith.addf %53, %58 : vector<2x2x128xf32>
    %cst_35 = arith.constant dense<0.000000e+00> : vector<2x128xf32>
    %60 = vector.multi_reduction <add>, %59, %cst_35 [1] : vector<2x2x128xf32> to vector<2x128xf32>
    %cst_36 = arith.constant dense<0.000000e+00> : vector<2x128xf32>
    %61 = vector.multi_reduction <add>, %14, %cst_36 [1] : vector<2x2x128xf32> to vector<2x128xf32>
    %62 = vector.shape_cast %25 : vector<128xf32> to vector<1x128xf32>
    %63 = vector.shape_cast %48 : vector<128xf32> to vector<1x128xf32>
    %64 = vector.shape_cast %49 : vector<128xf32> to vector<1x128xf32>
    %cst_37 = arith.constant 0.000000e+00 : f32
    %65 = vector.broadcast %cst_37 : f32 to vector<5x128xf32>
    %66 = tpu.concatenate %62, %63, %64, %65 in 0 : vector<1x128xf32>, vector<1x128xf32>, vector<1x128xf32>, vector<5x128xf32> -> vector<8x128xf32>
    %c0_38 = arith.constant 0 : index
    %c0_39 = arith.constant 0 : index
    %c0_40 = arith.constant 0 : index
    %67 = vector.load %arg8[%c0_38, %c0_39, %c0_40] : memref<1x8x128xf32, #tpu.memory_space<vmem>>, vector<1x8x128xf32>
    %68 = vector.shape_cast %67 : vector<1x8x128xf32> to vector<8x128xf32>
    %69 = arith.addf %68, %66 : vector<8x128xf32>
    %c0_41 = arith.constant 0 : index
    %c0_42 = arith.constant 0 : index
    %c0_43 = arith.constant 0 : index
    %70 = vector.load %arg8[%c0_41, %c0_42, %c0_43] : memref<1x8x128xf32, #tpu.memory_space<vmem>>, vector<1x8x128xf32>
    %71 = vector.shape_cast %70 : vector<1x8x128xf32> to vector<8x128xf32>
    %72 = vector.shape_cast %69 : vector<8x128xf32> to vector<1x8x128xf32>
    tpu.vector_store %arg8[%c0_41, %c0_42, %c0_43], %72 {strides = array<i32>} : memref<1x8x128xf32, #tpu.memory_space<vmem>>, vector<1x8x128xf32>,
    %c0_44 = arith.constant 0 : index
    %c0_45 = arith.constant 0 : index
    %c0_46 = arith.constant 0 : index
    %73 = vector.load %arg9[%c0_44, %c0_45, %c0_46] : memref<1x2x128xf32, #tpu.memory_space<vmem>>, vector<1x2x128xf32>
    %74 = vector.shape_cast %73 : vector<1x2x128xf32> to vector<2x128xf32>
    %75 = arith.addf %74, %60 : vector<2x128xf32>
    %c0_47 = arith.constant 0 : index
    %c0_48 = arith.constant 0 : index
    %c0_49 = arith.constant 0 : index
    %76 = vector.load %arg9[%c0_47, %c0_48, %c0_49] : memref<1x2x128xf32, #tpu.memory_space<vmem>>, vector<1x2x128xf32>
    %77 = vector.shape_cast %76 : vector<1x2x128xf32> to vector<2x128xf32>
    %78 = vector.shape_cast %75 : vector<2x128xf32> to vector<1x2x128xf32>
    tpu.vector_store %arg9[%c0_47, %c0_48, %c0_49], %78 {strides = array<i32>} : memref<1x2x128xf32, #tpu.memory_space<vmem>>, vector<1x2x128xf32>,
    %c0_50 = arith.constant 0 : index
    %c0_51 = arith.constant 0 : index
    %c0_52 = arith.constant 0 : index
    %79 = vector.load %arg10[%c0_50, %c0_51, %c0_52] : memref<1x2x128xf32, #tpu.memory_space<vmem>>, vector<1x2x128xf32>
    %80 = vector.shape_cast %79 : vector<1x2x128xf32> to vector<2x128xf32>
    %81 = arith.addf %80, %61 : vector<2x128xf32>
    %c0_53 = arith.constant 0 : index
    %c0_54 = arith.constant 0 : index
    %c0_55 = arith.constant 0 : index
    %82 = vector.load %arg10[%c0_53, %c0_54, %c0_55] : memref<1x2x128xf32, #tpu.memory_space<vmem>>, vector<1x2x128xf32>
    %83 = vector.shape_cast %82 : vector<1x2x128xf32> to vector<2x128xf32>
    %84 = vector.shape_cast %81 : vector<2x128xf32> to vector<1x2x128xf32>
    tpu.vector_store %arg10[%c0_53, %c0_54, %c0_55], %84 {strides = array<i32>} : memref<1x2x128xf32, #tpu.memory_space<vmem>>, vector<1x2x128xf32>,
    return
  }
  func.func @transform_0(%arg0: i32, %arg1: i32) -> (i32, i32, i32, i32) {
    %c0_i32 = arith.constant 0 : i32
    %c0_i32_0 = arith.constant 0 : i32
    %c0_i32_1 = arith.constant 0 : i32
    return %arg0, %c0_i32, %arg1, %c0_i32_0 : i32, i32, i32, i32
  }
  func.func @transform_1(%arg0: i32, %arg1: i32) -> (i32, i32, i32, i32) {
    %c1_i32 = arith.constant 1 : i32
    %c0_i32 = arith.constant 0 : i32
    %c0_i32_0 = arith.constant 0 : i32
    return %arg0, %c1_i32, %arg1, %c0_i32 : i32, i32, i32, i32
  }
  func.func @transform_2(%arg0: i32, %arg1: i32) -> (i32, i32, i32, i32) {
    %c2_i32 = arith.constant 2 : i32
    %c0_i32 = arith.constant 0 : i32
    %c0_i32_0 = arith.constant 0 : i32
    return %arg0, %c2_i32, %arg1, %c0_i32 : i32, i32, i32, i32
  }
  func.func @transform_3(%arg0: i32, %arg1: i32) -> (i32, i32, i32, i32) {
    %c0_i32 = arith.constant 0 : i32
    %c0_i32_0 = arith.constant 0 : i32
    %c0_i32_1 = arith.constant 0 : i32
    return %arg0, %c0_i32, %arg1, %c0_i32_0 : i32, i32, i32, i32
  }
  func.func @transform_4(%arg0: i32, %arg1: i32) -> (i32, i32, i32, i32) {
    %c1_i32 = arith.constant 1 : i32
    %c0_i32 = arith.constant 0 : i32
    %c0_i32_0 = arith.constant 0 : i32
    return %arg0, %c1_i32, %arg1, %c0_i32 : i32, i32, i32, i32
  }
  func.func @transform_5(%arg0: i32, %arg1: i32) -> (i32, i32, i32, i32) {
    %c2_i32 = arith.constant 2 : i32
    %c0_i32 = arith.constant 0 : i32
    %c0_i32_0 = arith.constant 0 : i32
    return %arg0, %c2_i32, %arg1, %c0_i32 : i32, i32, i32, i32
  }
  func.func @transform_6(%arg0: i32, %arg1: i32) -> (i32, i32, i32) {
    %c0_i32 = arith.constant 0 : i32
    %c0_i32_0 = arith.constant 0 : i32
    %c0_i32_1 = arith.constant 0 : i32
    return %arg0, %c0_i32, %c0_i32_0 : i32, i32, i32
  }
  func.func @transform_7(%arg0: i32, %arg1: i32) -> (i32, i32, i32) {
    %c0_i32 = arith.constant 0 : i32
    %c0_i32_0 = arith.constant 0 : i32
    %c0_i32_1 = arith.constant 0 : i32
    return %arg0, %c0_i32, %c0_i32_0 : i32, i32, i32
  }
  func.func @transform_8(%arg0: i32, %arg1: i32) -> (i32, i32, i32) {
    %c0_i32 = arith.constant 0 : i32
    %c0_i32_0 = arith.constant 0 : i32
    %c0_i32_1 = arith.constant 0 : i32
    return %arg0, %c0_i32, %c0_i32_0 : i32, i32, i32
  }
}

</mosaic_0001>

<llo_original>
// kernel: tpu_custom_call.1
$region0: #{tpu_custom_call.1}
  #allocation0 [shape = 'u32[]', space=smem, size = 0x4, offset = 0x4, fixed_abs, tag = 'smem constant byte address 0x4 - core index']
  #allocation1 [shape = 'u32[144,128]{1,0:T(1,128)}', space=vmem, size = 0x12000, scoped, tag = 'internal scratch']
  %s0 = inlined_call_operand.hbm [shape: f32[2,3,2,128], index: 0, kind: input, shape index: {}]
  %s1 = inlined_call_operand.hbm [shape: f32[2,3,2,128], index: 1, kind: input, shape index: {}]
  %s2 = inlined_call_operand.hbm [shape: f32[2,3,2,128], index: 2, kind: input, shape index: {}]
  %s3 = inlined_call_operand.hbm [shape: f32[2,3,2,128], index: 3, kind: input, shape index: {}]
  %s4 = inlined_call_operand.vmem [shape: f32[2,3,2,128], index: 4, kind: input, shape index: {}]
  %s5 = inlined_call_operand.hbm [shape: f32[2,3,2,128], index: 5, kind: input, shape index: {}]
  %s6 = inlined_call_operand.hbm [shape: f32[1,8,128], index: 6, kind: output, shape index: {0}]
  %s7 = inlined_call_operand.hbm [shape: f32[1,2,128], index: 7, kind: output, shape index: {1}]
  %s8 = inlined_call_operand.hbm [shape: f32[1,2,128], index: 8, kind: output, shape index: {2}]
  %9 = xla_tuple %s6, %s7, %s8
  %s10 = sld [smem:[#allocation0]]
  $region108: #{tpu_custom_call.1} parent=0
    _
  %s12 = ssub.s32 1, %s10
  %s13 = scalar_select 0, %s12, %s10
  $region1: #{tpu_custom_call.1} parent=0
    #allocation2 [shape = 'u8[2048]{0}', space=vmem, size = 0x800, scoped, tag = 'input window, operand 0, single buffered']
    #allocation3 [shape = 's32[1]{0}', space=sflag, size = 0x4, scoped, tag = 'scoped memory for tpu_custom_call.1']
    #allocation4 [shape = 's32[1]{0}', space=sflag, size = 0x4, scoped, tag = 'scoped memory for tpu_custom_call.1']
    #allocation5 [shape = 'u8[2048]{0}', space=vmem, size = 0x800, scoped, tag = 'input window, operand 1, single buffered']
    #allocation6 [shape = 's32[1]{0}', space=sflag, size = 0x4, scoped, tag = 'scoped memory for tpu_custom_call.1']
    #allocation7 [shape = 'u8[2048]{0}', space=vmem, size = 0x800, scoped, tag = 'input window, operand 2, single buffered']
    #allocation8 [shape = 'u8[2048]{0}', space=vmem, size = 0x800, scoped, tag = 'input window, operand 3, single buffered']
    #allocation9 [shape = 's32[1]{0}', space=sflag, size = 0x4, scoped, tag = 'scoped memory for tpu_custom_call.1']
    #allocation10 [shape = 'u8[2048]{0}', space=vmem, size = 0x800, scoped, tag = 'input window, operand 4, single buffered']
    #allocation11 [shape = 'u8[2048]{0}', space=vmem, size = 0x800, scoped, tag = 'input window, operand 5, single buffered']
    #allocation12 [shape = 'u8[4096]{0}', space=vmem, size = 0x1000, scoped, tag = 'output window, operand 0, single buffered']
    #allocation13 [shape = 'u8[1024]{0}', space=vmem, size = 0x400, scoped, tag = 'output window, operand 1, single buffered']
    #allocation14 [shape = 's32[1]{0}', space=sflag, size = 0x4, scoped, tag = 'scoped memory for tpu_custom_call.1']
    #allocation15 [shape = 'u8[1024]{0}', space=vmem, size = 0x400, scoped, tag = 'output window, operand 2, single buffered']
    %14 = vsyncpa [#allocation3], 0
    %15 = vsyncpa [#allocation6], 0
    %16 = vsyncpa [#allocation9], 0
    %17 = vsyncpa [#allocation4], 0
    %18 = vsyncpa [#allocation14], 0
    // Predicated region
    $region2: #{tpu_custom_call.1} parent=1 // pred_check
      _
    $region3: #{tpu_custom_call.1} parent=1 // pred_check_branch
      %20 = sbr.rel (0) target = $region5
    $region4: #{tpu_custom_call.1} parent=1 // pred_region
      %s22 = ssub.s32 64, 64
      %23 = vsyncadd [#allocation3], %s22
      %s24 = sshll.u32 [#allocation2], 4
      %s25 = int_to_ptr.vmem [resolvable:$true] %s24
      %30 = dma.hbm_to_vmem [thread:$0]  %s0, 64, %s25, [#allocation3], 96, 32, 2
    $region5: #{tpu_custom_call.1} parent=1 // pred_fallthru
      _
    // Predicated region
    $region6: #{tpu_custom_call.1} parent=1 // pred_check
      _
    $region7: #{tpu_custom_call.1} parent=1 // pred_check_branch
      %32 = sbr.rel (0) target = $region9
    $region8: #{tpu_custom_call.1} parent=1 // pred_region
      %s34 = ssub.s32 64, 64
      %35 = vsyncadd [#allocation6], %s34
      %s36 = scalar_lea.hbm %s1, 32
      %s37 = sshll.u32 [#allocation5], 4
      %s38 = int_to_ptr.vmem [resolvable:$true] %s37
      %43 = dma.hbm_to_vmem [thread:$0]  %s36, 64, %s38, [#allocation6], 96, 32, 2
    $region9: #{tpu_custom_call.1} parent=1 // pred_fallthru
      _
    // Predicated region
    $region10: #{tpu_custom_call.1} parent=1 // pred_check
      _
    $region11: #{tpu_custom_call.1} parent=1 // pred_check_branch
      %45 = sbr.rel (0) target = $region13
    $region12: #{tpu_custom_call.1} parent=1 // pred_region
      %s47 = ssub.s32 64, 64
      %48 = vsyncadd [#allocation6], %s47
      %s49 = scalar_lea.hbm %s2, 64
      %s50 = sshll.u32 [#allocation7], 4
      %s51 = int_to_ptr.vmem [resolvable:$true] %s50
      %56 = dma.hbm_to_vmem [thread:$0]  %s49, 64, %s51, [#allocation6], 96, 32, 2
    $region13: #{tpu_custom_call.1} parent=1 // pred_fallthru
      _
    // Predicated region
    $region14: #{tpu_custom_call.1} parent=1 // pred_check
      _
    $region15: #{tpu_custom_call.1} parent=1 // pred_check_branch
      %58 = sbr.rel (0) target = $region17
    $region16: #{tpu_custom_call.1} parent=1 // pred_region
      %s60 = ssub.s32 64, 64
      %61 = vsyncadd [#allocation9], %s60
      %s62 = sshll.u32 [#allocation8], 4
      %s63 = int_to_ptr.vmem [resolvable:$true] %s62
      %68 = dma.hbm_to_vmem [thread:$0]  %s3, 64, %s63, [#allocation9], 96, 32, 2
    $region17: #{tpu_custom_call.1} parent=1 // pred_fallthru
      _
    // Predicated region
    $region18: #{tpu_custom_call.1} parent=1 // pred_check
      _
    $region19: #{tpu_custom_call.1} parent=1 // pred_check_branch
      %70 = sbr.rel (0) target = $region21
    $region20: #{tpu_custom_call.1} parent=1 // pred_region
      %s71 = scalar_lea.vmem %s4, 2
      // Predicated region
      $region22: #{tpu_custom_call.1} parent=20 // pred_check
        _
      $region23: #{tpu_custom_call.1} parent=20 // pred_check_branch
        %73 = sbr.rel (0) target = $region25
      $region24: #{tpu_custom_call.1} parent=20 // pred_region
        // Predicated region
        $region26: #{tpu_custom_call.1} parent=24 // pred_check
          _
        $region27: #{tpu_custom_call.1} parent=24 // pred_check_branch
          %75 = sbr.rel target = $region29
        $region28: #{tpu_custom_call.1} parent=24 // pred_region
          // Predicated region
          $region41: #{tpu_custom_call.1} parent=28 // pred_check
            _
          $region42: #{tpu_custom_call.1} parent=28 // pred_check_branch
            %92 = sbr.rel (0) target = $region44
          $region43: #{tpu_custom_call.1} parent=28 // pred_region
            loop: start=0, step=1, limit=1
            $region45: #{tpu_custom_call.1} parent=43 // loop_pre_header
              _
            $region46: #{tpu_custom_call.1} parent=43 // loop_header
              %s95 = sphi 0, %s99
              %p96 = scmp.ge.s32.totalorder %s95, 1
              %s100 = sphi %s71, %s71
              %s101 = sphi [#allocation10], [#allocation10]
            $region47: #{tpu_custom_call.1} parent=43 // loop_header_branch
              %98 = sbr.rel (%p96) target = $region51
            $region48: #{tpu_custom_call.1} parent=43 // loop_body
              %v102 = vld [vmem:[%s100] sm:$0x3]
              %103 = vst [vmem:[%s101] sm:$0x3] %v102
              %v104 = vld [vmem:[%s100 + $0x6] sm:$0x3]
              %105 = vst [vmem:[%s101 + $0x2] sm:$0x3] %v104
            $region49: #{tpu_custom_call.1} parent=43 // loop_footer
              %s99 = sadd.s32 1, %s95
            $region50: #{tpu_custom_call.1} parent=43 // loop_footer_branch
              %94 = sbr.rel target = $region46
            $region51: #{tpu_custom_call.1} parent=43 // loop_exit
              _
          $region44: #{tpu_custom_call.1} parent=28 // pred_fallthru
            _
        $region29: #{tpu_custom_call.1} parent=24 // pred_fallthru
          _
        // Predicated region
        $region30: #{tpu_custom_call.1} parent=24 // pred_check
          _
        $region31: #{tpu_custom_call.1} parent=24 // pred_check_branch
          %77 = sbr.rel (0) target = $region33
        $region32: #{tpu_custom_call.1} parent=24 // pred_region
          loop: start=0, step=1, limit=1
          $region34: #{tpu_custom_call.1} parent=32 // loop_pre_header
            _
          $region35: #{tpu_custom_call.1} parent=32 // loop_header
            %s80 = sphi 0, %s84
            %p81 = scmp.ge.s32.totalorder %s80, 1
            %s85 = sphi %s71, %s71
            %s86 = sphi [#allocation10], [#allocation10]
          $region36: #{tpu_custom_call.1} parent=32 // loop_header_branch
            %83 = sbr.rel (%p81) target = $region40
          $region37: #{tpu_custom_call.1} parent=32 // loop_body
            %v87 = vld [vmem:[%s85] sm:$0x3]
            %88 = vst [vmem:[%s86] sm:$0x3] %v87
            %v89 = vld [vmem:[%s85 + $0x6] sm:$0x3]
            %90 = vst [vmem:[%s86 + $0x2] sm:$0x3] %v89
          $region38: #{tpu_custom_call.1} parent=32 // loop_footer
            %s84 = sadd.s32 1, %s80
          $region39: #{tpu_custom_call.1} parent=32 // loop_footer_branch
            %79 = sbr.rel target = $region35
          $region40: #{tpu_custom_call.1} parent=32 // loop_exit
            _
        $region33: #{tpu_custom_call.1} parent=24 // pred_fallthru
          _
      $region25: #{tpu_custom_call.1} parent=20 // pred_fallthru
        _
      %106 = vnop
    $region21: #{tpu_custom_call.1} parent=1 // pred_fallthru
      _
    // Predicated region
    $region52: #{tpu_custom_call.1} parent=1 // pred_check
      _
    $region53: #{tpu_custom_call.1} parent=1 // pred_check_branch
      %108 = sbr.rel (0) target = $region55
    $region54: #{tpu_custom_call.1} parent=1 // pred_region
      %s110 = ssub.s32 64, 64
      %111 = vsyncadd [#allocation9], %s110
      %s112 = scalar_lea.hbm %s5, 64
      %s113 = sshll.u32 [#allocation11], 4
      %s114 = int_to_ptr.vmem [resolvable:$true] %s113
      %119 = dma.hbm_to_vmem [thread:$0]  %s112, 64, %s114, [#allocation9], 96, 32, 2
    $region55: #{tpu_custom_call.1} parent=1 // pred_fallthru
      _
    // Predicated region
    $region56: #{tpu_custom_call.1} parent=1 // pred_check
      _
    $region57: #{tpu_custom_call.1} parent=1 // pred_check_branch
      %121 = sbr.rel (0) target = $region59
    $region58: #{tpu_custom_call.1} parent=1 // pred_region
      %122 = dma.done [#allocation3], 64
    $region59: #{tpu_custom_call.1} parent=1 // pred_fallthru
      _
    // Predicated region
    $region60: #{tpu_custom_call.1} parent=1 // pred_check
      _
    $region61: #{tpu_custom_call.1} parent=1 // pred_check_branch
      %124 = sbr.rel (0) target = $region63
    $region62: #{tpu_custom_call.1} parent=1 // pred_region
      %125 = dma.done [#allocation6], 64
    $region63: #{tpu_custom_call.1} parent=1 // pred_fallthru
      _
    // Predicated region
    $region64: #{tpu_custom_call.1} parent=1 // pred_check
      _
    $region65: #{tpu_custom_call.1} parent=1 // pred_check_branch
      %127 = sbr.rel (0) target = $region67
    $region66: #{tpu_custom_call.1} parent=1 // pred_region
      %128 = dma.done [#allocation6], 64
    $region67: #{tpu_custom_call.1} parent=1 // pred_fallthru
      _
    // Predicated region
    $region68: #{tpu_custom_call.1} parent=1 // pred_check
      _
    $region69: #{tpu_custom_call.1} parent=1 // pred_check_branch
      %130 = sbr.rel (0) target = $region71
    $region70: #{tpu_custom_call.1} parent=1 // pred_region
      %131 = dma.done [#allocation9], 64
    $region71: #{tpu_custom_call.1} parent=1 // pred_fallthru
      _
    // Predicated region
    $region72: #{tpu_custom_call.1} parent=1 // pred_check
      _
    $region73: #{tpu_custom_call.1} parent=1 // pred_check_branch
      %133 = sbr.rel (0) target = $region75
    $region74: #{tpu_custom_call.1} parent=1 // pred_region
      _
    $region75: #{tpu_custom_call.1} parent=1 // pred_fallthru
      _
    // Predicated region
    $region76: #{tpu_custom_call.1} parent=1 // pred_check
      _
    $region77: #{tpu_custom_call.1} parent=1 // pred_check_branch
      %135 = sbr.rel (0) target = $region79
    $region78: #{tpu_custom_call.1} parent=1 // pred_region
      %136 = dma.done [#allocation9], 64
    $region79: #{tpu_custom_call.1} parent=1 // pred_fallthru
      _
    %p137 = scmp.eq.s32.totalorder 0, 0
    // Predicated region
    $region80: #{tpu_custom_call.1} parent=1 // pred_check
      %p138 = pneg %p137
    $region81: #{tpu_custom_call.1} parent=1 // pred_check_branch
      %140 = sbr.rel (%p138) target = $region83
    $region82: #{tpu_custom_call.1} parent=1 // pred_region
      %141 = vst [vmem:[#allocation12] sm:$0xff] 0.0
      %142 = vst [vmem:[#allocation13] sm:$0x3] 0.0
      %143 = vst [vmem:[#allocation15] sm:$0x3] 0.0
    $region83: #{tpu_custom_call.1} parent=1 // pred_fallthru
      _
    %v144 = vld [vmem:[#allocation2] sm:$0x3]
    %v145 = vld [vmem:[#allocation2 + $0x2] sm:$0x3]
    %v146 = vld [vmem:[#allocation5] sm:$0x3]
    %v147 = vld [vmem:[#allocation5 + $0x2] sm:$0x3]
    %v148 = vld [vmem:[#allocation7] sm:$0x3]
    %v149 = vld [vmem:[#allocation7 + $0x2] sm:$0x3]
    %v150 = vld [vmem:[#allocation8] sm:$0x3]
    %v151 = vld [vmem:[#allocation8 + $0x2] sm:$0x3]
    %v152 = vld [vmem:[#allocation10] sm:$0x3]
    %v153 = vld [vmem:[#allocation10 + $0x2] sm:$0x3]
    %v154 = vld [vmem:[#allocation11] sm:$0x3]
    %v155 = vld [vmem:[#allocation11 + $0x2] sm:$0x3]
    %v156 = vmax.f32 %v144, 0.0
    %v157 = vmax.f32 %v145, 0.0
    %v158 = vmul.f32 %v144, %v150
    %v159 = vmul.f32 %v145, %v151
    %v160 = vsub.f32 %v156, %v158
    %v161 = vsub.f32 %v157, %v159
    %v162 = vand.u32 2147483647, %v144
    %v163 = vand.u32 2147483647, %v145
    %v164 = vsub.f32 0.0, %v162
    %v165 = vsub.f32 0.0, %v163
    %v166 = vmul.f32 %v164, 1.442695
    %v167 = vpow.pop %v166
    %v168 = vmul.f32 %v165, 1.442695
    %v169 = vpow.pop %v168
    %v170 = vadd.f32 %v167, 1.0
    %v171 = vlog2.pop %v170
    %v172 = vmul.f32 %v171, 0.6931472
    %v173 = vmul.f32 -0.5, %v167
    %v174 = vadd.f32 %v173, 1.0
    %v175 = vmul.f32 %v174, %v167
    %v176 = vand.u32 2147483647, %v167
    %vm177 = vcmp.lt.f32.partialorder %v176, 0.0004427343
    %v178 = vsel %vm177, %v175, %v172
    %v179 = vadd.f32 %v169, 1.0
    %v180 = vlog2.pop %v179
    %v181 = vmul.f32 %v180, 0.6931472
    %v182 = vmul.f32 -0.5, %v169
    %v183 = vadd.f32 %v182, 1.0
    %v184 = vmul.f32 %v183, %v169
    %v185 = vand.u32 2147483647, %v169
    %vm186 = vcmp.lt.f32.partialorder %v185, 0.0004427343
    %v187 = vsel %vm186, %v184, %v181
    %v188 = vadd.f32 %v160, %v178
    %v189 = vadd.f32 %v161, %v187
    %vm190 = vcmask 1041408
    %v191 = vsel %vm190, %v188, 0.0
    %v192 = vsel %vm190, %v189, 0.0
    %v193 = vadd.f32 %v191, %v192
    %v194 = vrot.slane %v193, 4
    %v195 = vadd.f32 %v193, %v194
    %v196 = vrot.slane %v195, 2
    %v197 = vadd.f32 %v195, %v196
    %v198 = vrot.slane %v197, 1
    %v199 = vadd.f32 %v197, %v198
    %v200 = vmul.f32 %v154, %v150
    %v201 = vmul.f32 %v155, %v151
    %v202 = vsub.f32 %v154, %v200
    %v203 = vsub.f32 %v155, %v201
    %v204 = vsub.f32 1.0, %v152
    %v205 = vsub.f32 1.0, %v153
    %v206 = vmul.f32 %v202, %v204
    %v207 = vmul.f32 %v203, %v205
    %v208 = vsub.f32 1.0, %v206
    %v209 = vsub.f32 1.0, %v207
    %vm210 = vcmp.ne.f32.partialorder %v208, 0.0
    %vm211 = vcmp.ne.f32.partialorder %v209, 0.0
    %v212 = vsel %vm210, 1, 0
    %v213 = vsel %vm211, 1, 0
    %v214 = vcvt.s32.f32 %v212
    %v215 = vcvt.s32.f32 %v213
    %v216 = vmax.f32 %v146, 0.0
    %v217 = vmax.f32 %v147, 0.0
    %v218 = vmul.f32 %v146, %v152
    %v219 = vmul.f32 %v147, %v153
    %v220 = vsub.f32 %v216, %v218
    %v221 = vsub.f32 %v217, %v219
    %v222 = vand.u32 2147483647, %v146
    %v223 = vand.u32 2147483647, %v147
    %v224 = vsub.f32 0.0, %v222
    %v225 = vsub.f32 0.0, %v223
    %v226 = vmul.f32 %v224, 1.442695
    %v227 = vpow.pop %v226
    %v228 = vmul.f32 %v225, 1.442695
    %v229 = vpow.pop %v228
    %v230 = vadd.f32 %v227, 1.0
    %v231 = vlog2.pop %v230
    %v232 = vmul.f32 %v231, 0.6931472
    %v233 = vmul.f32 -0.5, %v227
    %v234 = vadd.f32 %v233, 1.0
    %v235 = vmul.f32 %v234, %v227
    %v236 = vand.u32 2147483647, %v227
    %vm237 = vcmp.lt.f32.partialorder %v236, 0.0004427343
    %v238 = vsel %vm237, %v235, %v232
    %v239 = vadd.f32 %v229, 1.0
    %v240 = vlog2.pop %v239
    %v241 = vmul.f32 %v240, 0.6931472
    %v242 = vmul.f32 -0.5, %v229
    %v243 = vadd.f32 %v242, 1.0
    %v244 = vmul.f32 %v243, %v229
    %v245 = vand.u32 2147483647, %v229
    %vm246 = vcmp.lt.f32.partialorder %v245, 0.0004427343
    %v247 = vsel %vm246, %v244, %v241
    %v248 = vadd.f32 %v220, %v238
    %v249 = vadd.f32 %v221, %v247
    %v250 = vmul.f32 %v214, %v248
    %v251 = vmul.f32 %v215, %v249
    %v252 = vsel %vm190, %v250, 0.0
    %v253 = vsel %vm190, %v251, 0.0
    %v254 = vadd.f32 %v252, %v253
    %v255 = vrot.slane %v254, 4
    %v256 = vadd.f32 %v254, %v255
    %v257 = vrot.slane %v256, 2
    %v258 = vadd.f32 %v256, %v257
    %v259 = vrot.slane %v258, 1
    %v260 = vadd.f32 %v258, %v259
    %v261 = vsel %vm190, %v214, 0.0
    %v262 = vsel %vm190, %v215, 0.0
    %v263 = vadd.f32 %v261, %v262
    %v264 = vrot.slane %v263, 4
    %v265 = vadd.f32 %v263, %v264
    %v266 = vrot.slane %v265, 2
    %v267 = vadd.f32 %v265, %v266
    %v268 = vrot.slane %v267, 1
    %v269 = vadd.f32 %v267, %v268
    %v270 = vmax.f32 %v148, 0.0
    %v271 = vmax.f32 %v149, 0.0
    %v272 = vmul.f32 %v148, %v202
    %v273 = vmul.f32 %v149, %v203
    %v274 = vsub.f32 %v270, %v272
    %v275 = vsub.f32 %v271, %v273
    %v276 = vand.u32 2147483647, %v148
    %v277 = vand.u32 2147483647, %v149
    %v278 = vsub.f32 0.0, %v276
    %v279 = vsub.f32 0.0, %v277
    %v280 = vmul.f32 %v278, 1.442695
    %v281 = vpow.pop %v280
    %v282 = vmul.f32 %v279, 1.442695
    %v283 = vpow.pop %v282
    %v284 = vadd.f32 %v281, 1.0
    %v285 = vlog2.pop %v284
    %v286 = vmul.f32 %v285, 0.6931472
    %v287 = vmul.f32 -0.5, %v281
    %v288 = vadd.f32 %v287, 1.0
    %v289 = vmul.f32 %v288, %v281
    %v290 = vand.u32 2147483647, %v281
    %vm291 = vcmp.lt.f32.partialorder %v290, 0.0004427343
    %v292 = vsel %vm291, %v289, %v286
    %v293 = vadd.f32 %v283, 1.0
    %v294 = vlog2.pop %v293
    %v295 = vmul.f32 %v294, 0.6931472
    %v296 = vmul.f32 -0.5, %v283
    %v297 = vadd.f32 %v296, 1.0
    %v298 = vmul.f32 %v297, %v283
    %v299 = vand.u32 2147483647, %v283
    %vm300 = vcmp.lt.f32.partialorder %v299, 0.0004427343
    %v301 = vsel %vm300, %v298, %v295
    %v302 = vadd.f32 %v274, %v292
    %v303 = vadd.f32 %v275, %v301
    %v304 = vsel %vm190, %v302, 0.0
    %v305 = vrot.slane %v304, 4
    %v306 = vadd.f32 %v304, %v305
    %v307 = vrot.slane %v306, 2
    %v308 = vadd.f32 %v306, %v307
    %v309 = vrot.slane %v308, 1
    %v310 = vadd.f32 %v308, %v309
    %v311 = vsel %vm190, %v303, 0.0
    %v312 = vrot.slane %v311, 4
    %v313 = vadd.f32 %v311, %v312
    %v314 = vrot.slane %v313, 2
    %v315 = vadd.f32 %v313, %v314
    %v316 = vrot.slane %v315, 1
    %v317 = vadd.f32 %v315, %v316
    %v318 = vsel %vm190, %v154, 0.0
    %v319 = vrot.slane %v318, 4
    %v320 = vadd.f32 %v318, %v319
    %v321 = vrot.slane %v320, 2
    %v322 = vadd.f32 %v320, %v321
    %v323 = vrot.slane %v322, 1
    %v324 = vadd.f32 %v322, %v323
    %v325 = vsel %vm190, %v155, 0.0
    %v326 = vrot.slane %v325, 4
    %v327 = vadd.f32 %v325, %v326
    %v328 = vrot.slane %v327, 2
    %v329 = vadd.f32 %v327, %v328
    %v330 = vrot.slane %v329, 1
    %v331 = vadd.f32 %v329, %v330
    %vm332 = vcmask 1040384
    %v333 = vsel %vm332, %v199, %v260
    %v334 = vsel %vm190, %v333, %v269
    %vm335 = vcmask 1042432
    %v336 = vsel %vm335, %v334, 0.0
    %v337 = vld [vmem:[#allocation12] sm:$0xff]
    %v338 = vadd.f32 %v337, %v336
    %339 = vst [vmem:[#allocation12] sm:$0xff] %v338
    %v340 = vld [vmem:[#allocation13] sm:$0x3]
    %vm343 = vcmask 1041409
    %v344 = vsel %vm343, %v317, %v310
    %v346 = vadd.f32 %v340, %v344
    %347 = vst [vmem:[#allocation13] sm:$0x3] %v346
    %v348 = vld [vmem:[#allocation15] sm:$0x3]
    %v351 = vsel %vm343, %v331, %v324
    %v353 = vadd.f32 %v348, %v351
    %354 = vst [vmem:[#allocation15] sm:$0x3] %v353
    // Predicated region
    $region84: #{tpu_custom_call.1} parent=1 // pred_check
      _
    $region85: #{tpu_custom_call.1} parent=1 // pred_check_branch
      %356 = sbr.rel (0) target = $region87
    $region86: #{tpu_custom_call.1} parent=1 // pred_region
      %s358 = ssub.s32 128, 128
      %359 = vsyncadd [#allocation4], %s358
      %s361 = sshll.u32 [#allocation12], 4
      %s362 = int_to_ptr.vmem [resolvable:$true] %s361
      %364 = dma.vmem_to_hbm [thread:$0]  %s362, 128, %s6, [#allocation4]
    $region87: #{tpu_custom_call.1} parent=1 // pred_fallthru
      _
    // Predicated region
    $region88: #{tpu_custom_call.1} parent=1 // pred_check
      _
    $region89: #{tpu_custom_call.1} parent=1 // pred_check_branch
      %366 = sbr.rel (0) target = $region91
    $region90: #{tpu_custom_call.1} parent=1 // pred_region
      %s368 = ssub.s32 32, 32
      %369 = vsyncadd [#allocation14], %s368
      %s371 = sshll.u32 [#allocation13], 4
      %s372 = int_to_ptr.vmem [resolvable:$true] %s371
      %374 = dma.vmem_to_hbm [thread:$0]  %s372, 32, %s7, [#allocation14]
    $region91: #{tpu_custom_call.1} parent=1 // pred_fallthru
      _
    // Predicated region
    $region92: #{tpu_custom_call.1} parent=1 // pred_check
      _
    $region93: #{tpu_custom_call.1} parent=1 // pred_check_branch
      %376 = sbr.rel (0) target = $region95
    $region94: #{tpu_custom_call.1} parent=1 // pred_region
      %s378 = ssub.s32 32, 32
      %379 = vsyncadd [#allocation14], %s378
      %s381 = sshll.u32 [#allocation15], 4
      %s382 = int_to_ptr.vmem [resolvable:$true] %s381
      %384 = dma.vmem_to_hbm [thread:$0]  %s382, 32, %s8, [#allocation14]
    $region95: #{tpu_custom_call.1} parent=1 // pred_fallthru
      _
    // Predicated region
    $region96: #{tpu_custom_call.1} parent=1 // pred_check
      _
    $region97: #{tpu_custom_call.1} parent=1 // pred_check_branch
      %386 = sbr.rel (0) target = $region99
    $region98: #{tpu_custom_call.1} parent=1 // pred_region
      %387 = dma.done [#allocation4], 128
    $region99: #{tpu_custom_call.1} parent=1 // pred_fallthru
      _
    // Predicated region
    $region100: #{tpu_custom_call.1} parent=1 // pred_check
      _
    $region101: #{tpu_custom_call.1} parent=1 // pred_check_branch
      %389 = sbr.rel (0) target = $region103
    $region102: #{tpu_custom_call.1} parent=1 // pred_region
      %390 = dma.done [#allocation14], 32
    $region103: #{tpu_custom_call.1} parent=1 // pred_fallthru
      _
    // Predicated region
    $region104: #{tpu_custom_call.1} parent=1 // pred_check
      _
    $region105: #{tpu_custom_call.1} parent=1 // pred_check_branch
      %392 = sbr.rel (0) target = $region107
    $region106: #{tpu_custom_call.1} parent=1 // pred_region
      %393 = dma.done [#allocation14], 32
    $region107: #{tpu_custom_call.1} parent=1 // pred_fallthru
      _
    %394 = vsyncpa [#allocation3], 1
    %395 = vsyncpa [#allocation6], 1
    %396 = vsyncpa [#allocation9], 1
    %397 = vsyncpa [#allocation4], 1
    %398 = vsyncpa [#allocation14], 1

</llo_original>
